<compile_context>
chip_gen: v7x
topology: tpu7x:2x2x1
jax: 0.10.0
libtpu: 0.0.40
codegen_flags: <defaults>
</compile_context>

<pallas_src>
import functools

import jax
import jax.numpy as jnp
from jax.experimental import pallas as pl
from jax.experimental.pallas import tpu as pltpu


def _ce_loss_kernel(pred_ref, tgt_ref, col_ref, out_ref, acc_ref, *,
                    on_val, off_val, n_rows, row_block, steps, has_tail):
    """grid = (P, steps): P is the (megacore) parallel axis, steps is the
    sequential reduction over row blocks.

    pred_ref: (rb, C) f32 tile of predictions
    tgt_ref : (rb, 1) i32 tile of target class indices
    col_ref : (1,  C) i32 column indices (grid-invariant constant)
    out_ref : (1,  1) f32 per-P partial sum (negated, un-normalised)
    acc_ref : (1,  1) f32 VMEM scalar accumulator (persists across `i`)
    """
    p = pl.program_id(0)
    i = pl.program_id(1)

    @pl.when(i == 0)
    def _init():
        acc_ref[...] = jnp.zeros(acc_ref.shape, jnp.float32)

    pred = pred_ref[...]                       # (rb, C) f32
    tgt = tgt_ref[...]                         # (rb, 1) i32
    col = col_ref[...]                         # (1,  C) i32
    on = jnp.float32(on_val)
    off = jnp.float32(off_val)

    def accumulate(mask_tail):
        # Label-smoothed one-hot weight without materialising the one-hot:
        #   on_val  = clamp(1.0, ls/(C-1), 1-ls) = 1 - ls
        #   off_val = clamp(0.0, ls/(C-1), 1-ls) = ls / (C-1)
        w = jnp.where(col == tgt, on, off)     # (rb, C)
        contrib = w * pred
        if mask_tail:
            # Only the globally-last block can be partial; mask the *product*
            # so stale/NaN rows beyond n_rows are dropped, not multiplied.
            row = jax.lax.broadcasted_iota(jnp.int32, (pred.shape[0], 1), 0)
            global_row = (p * steps + i) * row_block + row     # (rb, 1)
            contrib = jnp.where(global_row < n_rows, contrib, jnp.float32(0.0))
        # Single full-tile reduce per step (VALU tree add + XLU finish) into
        # the scalar accumulator — no (rb, C) accumulator read-modify-write.
        acc_ref[...] = acc_ref[...] + jnp.sum(contrib)

    if has_tail:
        is_tail = jnp.logical_and(p == pl.num_programs(0) - 1,
                                  i == pl.num_programs(1) - 1)

        @pl.when(is_tail)
        def _tail():
            accumulate(True)

        @pl.when(jnp.logical_not(is_tail))
        def _steady():
            accumulate(False)
    else:
        accumulate(False)

    @pl.when(i == pl.num_programs(1) - 1)
    def _finalize():
        out_ref[...] = (-acc_ref[...]).astype(out_ref.dtype)


def _ce_loss_ref(pred, target, *, label_smooth=0.1, class_num=137):
    """Plain-JAX reference matching the PyTorch module."""
    lo = label_smooth / (class_num - 1)
    hi = 1.0 - label_smooth
    oh = jax.nn.one_hot(target, class_num, dtype=jnp.float32)
    tgt = jnp.clip(oh, lo, hi)
    return jnp.mean(-jnp.sum(tgt * pred, axis=1))


def _num_tensorcores_per_chip():
    """2 on v7x (dual TensorCore), 1 on v5e/v6e/unknown."""
    try:
        kind = jax.devices()[0].device_kind.lower()
    except Exception:
        return 1
    return 2 if ("v7" in kind or "7x" in kind) else 1


def ce_loss(pred, target, *, label_smooth=0.1, class_num=137,
            row_block=1024, force_pallas=False):
    """Pallas implementation of CELoss.forward (label_smooth branch).

    pred:   [N, C] float32
    target: [N]    int class indices in [0, class_num)
    returns scalar float32 mean loss.
    """
    n, c = pred.shape
    assert c == class_num, "pred second dim must equal class_num"

    # Tiny inputs: pallas_call launch + pipeline warm-up exceeds the compute;
    # let XLA fuse it instead (the demo forces the kernel path explicitly).
    if not force_pallas and n * c < (1 << 16):
        return _ce_loss_ref(pred, target, label_smooth=label_smooth,
                            class_num=class_num)

    lo = label_smooth / (class_num - 1)
    hi = 1.0 - label_smooth
    on_val = float(min(max(1.0, lo), hi))    # clamp(1.0)
    off_val = float(min(max(0.0, lo), hi))   # clamp(0.0)

    # Large, sublane-aligned row tiles, clamped to N.
    rb = max(8, min(int(row_block), ((n + 7) // 8) * 8))
    rb = (rb // 8) * 8
    n_blocks = pl.cdiv(n, rb)
    has_tail = (n % rb) != 0

    # 2-way outer split only on dual-TC chips (v7x) and only when it divides
    # n_blocks exactly -> no ghost blocks ever mapped past the array.
    n_cores = _num_tensorcores_per_chip()
    p_parallel = 2 if (n_cores >= 2 and n_blocks >= 2 and n_blocks % 2 == 0) else 1
    steps = n_blocks // p_parallel

    target2d = target.astype(jnp.int32).reshape(n, 1)
    col_ids = jnp.arange(c, dtype=jnp.int32).reshape(1, c)   # grid-invariant

    kernel = functools.partial(
        _ce_loss_kernel, on_val=on_val, off_val=off_val,
        n_rows=n, row_block=rb, steps=steps, has_tail=has_tail,
    )

    partials = pl.pallas_call(
        kernel,
        out_shape=jax.ShapeDtypeStruct((p_parallel, 1), jnp.float32),
        grid_spec=pltpu.PrefetchScalarGridSpec(
            num_scalar_prefetch=0,
            grid=(p_parallel, steps),
            in_specs=[
                pl.BlockSpec((rb, c), lambda p, i: (p * steps + i, 0)),  # pred rows
                pl.BlockSpec((rb, 1), lambda p, i: (p * steps + i, 0)),  # target rows
                pl.BlockSpec((1, c), lambda p, i: (0, 0)),               # col ids (const)
            ],
            out_specs=pl.BlockSpec((1, 1), lambda p, i: (p, 0)),         # per-P partial
            scratch_shapes=[pltpu.VMEM((1, 1), jnp.float32)],
        ),
        compiler_params=pltpu.CompilerParams(
            dimension_semantics=("parallel", "arbitrary"),
        ),
    )(pred, target2d, col_ids)

    return jnp.sum(partials) / jnp.float32(n)


if __name__ == "__main__":
    CLASS_NUM = 137
    LABEL_SMOOTH = 0.1

    key = jax.random.PRNGKey(0)
    ks = jax.random.split(key, 6)

    # Case 1: small shape implied by the module (N=64 rows of [N, class_num]);
    # single block, no tail. Force the Pallas path so the kernel is exercised.
    N1 = 64
    pred1 = jax.random.normal(ks[0], (N1, CLASS_NUM), dtype=jnp.float32)
    tgt1 = jax.random.randint(ks[1], (N1,), 0, CLASS_NUM, dtype=jnp.int32)
    out1 = jax.block_until_ready(
        ce_loss(pred1, tgt1, label_smooth=LABEL_SMOOTH, class_num=CLASS_NUM,
                force_pallas=True))
    ref1 = _ce_loss_ref(pred1, tgt1, label_smooth=LABEL_SMOOTH, class_num=CLASS_NUM)
    assert jnp.allclose(out1, ref1, rtol=1e-5, atol=1e-5), (out1, ref1)

    # Case 2: N not divisible by the row block, odd block count -> exercises
    # multi-step accumulation plus the tail-only masked path (the previous
    # NaN-from-stale-VMEM failure mode).
    N2 = 600
    pred2 = jax.random.normal(ks[2], (N2, CLASS_NUM), dtype=jnp.float32)
    tgt2 = jax.random.randint(ks[3], (N2,), 0, CLASS_NUM, dtype=jnp.int32)
    out2 = jax.block_until_ready(
        ce_loss(pred2, tgt2, label_smooth=LABEL_SMOOTH, class_num=CLASS_NUM,
                row_block=256, force_pallas=True))
    ref2 = _ce_loss_ref(pred2, tgt2, label_smooth=LABEL_SMOOTH, class_num=CLASS_NUM)
    assert jnp.allclose(out2, ref2, rtol=1e-4, atol=1e-5), (out2, ref2)

    # Case 3: even block count, no tail -> exercises the 2-way outer split on
    # v7x (P=1 elsewhere), with every block explicitly in-bounds.
    N3 = 512
    pred3 = jax.random.normal(ks[4], (N3, CLASS_NUM), dtype=jnp.float32)
    tgt3 = jax.random.randint(ks[5], (N3,), 0, CLASS_NUM, dtype=jnp.int32)
    out3 = jax.block_until_ready(
        ce_loss(pred3, tgt3, label_smooth=LABEL_SMOOTH, class_num=CLASS_NUM,
                row_block=256, force_pallas=True))
    ref3 = _ce_loss_ref(pred3, tgt3, label_smooth=LABEL_SMOOTH, class_num=CLASS_NUM)
    assert jnp.allclose(out3, ref3, rtol=1e-4, atol=1e-5), (out3, ref3)

    # TODO(synk): the label_smooth=None branch of the PyTorch module only prints
    # and drops into pdb; it is intentionally not implemented.
    print("KERNEL_OK")
</pallas_src>

<mosaic_0001>
module attributes {stable_mosaic.version = 11 : i64} {
  func.func @_ce_loss_kernel(%arg0: i32, %arg1: i32, %arg2: memref<64x137xf32, #tpu.memory_space<vmem>>, %arg3: memref<64x1xi32, #tpu.memory_space<vmem>>, %arg4: memref<1x137xi32, #tpu.memory_space<vmem>>, %arg5: memref<1x1xf32, #tpu.memory_space<vmem>>, %arg6: memref<1x1xf32, #tpu.memory_space<vmem>>) attributes {dimension_semantics = [#tpu.dimension_semantics<parallel>, #tpu.dimension_semantics<arbitrary>], iteration_bounds = array<i64: 1, 1>, scalar_prefetch = 0 : i64, scratch_operands = 1 : i64, tpu.core_type = #tpu.core_type<tc>, window_params = [{transform_indices = @transform_0, window_bounds = array<i64: 64, 137>}, {transform_indices = @transform_1, window_bounds = array<i64: 64, 1>}, {pipeline_mode = #tpu.pipeline_mode<synchronous>, transform_indices = @transform_2, window_bounds = array<i64: 1, 137>}, {transform_indices = @transform_3, window_bounds = array<i64: 1, 1>}]} {
    %c0_i32 = arith.constant 0 : i32
    %0 = arith.cmpi eq, %arg1, %c0_i32 : i32
    %1 = arith.extui %0 : i1 to i32
    %c0_i32_0 = arith.constant 0 : i32
    %2 = arith.cmpi ne, %1, %c0_i32_0 : i32
    scf.if %2 {
      %cst_14 = arith.constant 0.000000e+00 : f32
      %24 = vector.broadcast %cst_14 : f32 to vector<1x1xf32>
      %c0_15 = arith.constant 0 : index
      %c0_16 = arith.constant 0 : index
      %25 = vector.load %arg6[%c0_15, %c0_16] : memref<1x1xf32, #tpu.memory_space<vmem>>, vector<1x1xf32>
      tpu.vector_store %arg6[%c0_15, %c0_16], %24 {strides = array<i32>} : memref<1x1xf32, #tpu.memory_space<vmem>>, vector<1x1xf32>,
    } else {
    }
    %c0 = arith.constant 0 : index
    %c0_1 = arith.constant 0 : index
    %3 = vector.load %arg2[%c0, %c0_1] : memref<64x137xf32, #tpu.memory_space<vmem>>, vector<64x137xf32>
    %c0_2 = arith.constant 0 : index
    %c0_3 = arith.constant 0 : index
    %4 = vector.load %arg3[%c0_2, %c0_3] : memref<64x1xi32, #tpu.memory_space<vmem>>, vector<64x1xi32>
    %c0_4 = arith.constant 0 : index
    %c0_5 = arith.constant 0 : index
    %5 = vector.load %arg4[%c0_4, %c0_5] : memref<1x137xi32, #tpu.memory_space<vmem>>, vector<1x137xi32>
    %6 = vector.broadcast %5 : vector<1x137xi32> to vector<64x137xi32>
    %7 = vector.broadcast %4 : vector<64x1xi32> to vector<64x137xi32>
    %8 = arith.cmpi eq, %6, %7 : vector<64x137xi32>
    %cst = arith.constant 0.899999976 : f32
    %cst_6 = arith.constant 7.35294132E-4 : f32
    %9 = vector.broadcast %cst : f32 to vector<64x137xf32>
    %10 = vector.broadcast %cst_6 : f32 to vector<64x137xf32>
    %11 = arith.select %8, %9, %10 : vector<64x137xi1>, vector<64x137xf32>
    %12 = arith.mulf %11, %3 : vector<64x137xf32>
    %c0_7 = arith.constant 0 : index
    %c0_8 = arith.constant 0 : index
    %13 = vector.load %arg6[%c0_7, %c0_8] : memref<1x1xf32, #tpu.memory_space<vmem>>, vector<1x1xf32>
    %14 = vector.shape_cast %12 : vector<64x137xf32> to vector<1x64x137xf32>
    %cst_9 = arith.constant dense<0.000000e+00> : vector<1xf32>
    %15 = vector.multi_reduction <add>, %14, %cst_9 [1, 2] : vector<1x64x137xf32> to vector<1xf32>
    %16 = vector.shape_cast %15 : vector<1xf32> to vector<1x1x1xf32>
    %17 = vector.extract %16[0, 0, 0] : f32 from vector<1x1x1xf32>
    %18 = vector.broadcast %17 : f32 to vector<1x1xf32>
    %19 = arith.addf %13, %18 : vector<1x1xf32>
    %c0_10 = arith.constant 0 : index
    %c0_11 = arith.constant 0 : index
    %20 = vector.load %arg6[%c0_10, %c0_11] : memref<1x1xf32, #tpu.memory_space<vmem>>, vector<1x1xf32>
    tpu.vector_store %arg6[%c0_10, %c0_11], %19 {strides = array<i32>} : memref<1x1xf32, #tpu.memory_space<vmem>>, vector<1x1xf32>,
    %c0_i32_12 = arith.constant 0 : i32
    %21 = arith.cmpi eq, %arg1, %c0_i32_12 : i32
    %22 = arith.extui %21 : i1 to i32
    %c0_i32_13 = arith.constant 0 : i32
    %23 = arith.cmpi ne, %22, %c0_i32_13 : i32
    scf.if %23 {
      %c0_14 = arith.constant 0 : index
      %c0_15 = arith.constant 0 : index
      %24 = vector.load %arg6[%c0_14, %c0_15] : memref<1x1xf32, #tpu.memory_space<vmem>>, vector<1x1xf32>
      %cst_16 = arith.constant 0.000000e+00 : f32
      %25 = vector.broadcast %cst_16 : f32 to vector<1x1xf32>
      %26 = arith.subf %25, %24 : vector<1x1xf32>
      %c0_17 = arith.constant 0 : index
      %c0_18 = arith.constant 0 : index
      %27 = vector.load %arg5[%c0_17, %c0_18] : memref<1x1xf32, #tpu.memory_space<vmem>>, vector<1x1xf32>
      tpu.vector_store %arg5[%c0_17, %c0_18], %26 {strides = array<i32>} : memref<1x1xf32, #tpu.memory_space<vmem>>, vector<1x1xf32>,
    } else {
    }
    return
  }
  func.func @transform_0(%arg0: i32, %arg1: i32) -> (i32, i32) {
    %c1_i32 = arith.constant 1 : i32
    %0 = arith.muli %arg0, %c1_i32 : i32
    %1 = arith.addi %0, %arg1 : i32
    %c0_i32 = arith.constant 0 : i32
    %c0_i32_0 = arith.constant 0 : i32
    return %1, %c0_i32 : i32, i32
  }
  func.func @transform_1(%arg0: i32, %arg1: i32) -> (i32, i32) {
    %c1_i32 = arith.constant 1 : i32
    %0 = arith.muli %arg0, %c1_i32 : i32
    %1 = arith.addi %0, %arg1 : i32
    %c0_i32 = arith.constant 0 : i32
    %c0_i32_0 = arith.constant 0 : i32
    return %1, %c0_i32 : i32, i32
  }
  func.func @transform_2(%arg0: i32, %arg1: i32) -> (i32, i32) {
    %c0_i32 = arith.constant 0 : i32
    %c0_i32_0 = arith.constant 0 : i32
    %c0_i32_1 = arith.constant 0 : i32
    return %c0_i32, %c0_i32_0 : i32, i32
  }
  func.func @transform_3(%arg0: i32, %arg1: i32) -> (i32, i32) {
    %c0_i32 = arith.constant 0 : i32
    %c0_i32_0 = arith.constant 0 : i32
    return %arg0, %c0_i32 : i32, i32
  }
}

</mosaic_0001>

<llo_original>
// kernel: tpu_custom_call.1
$region0: #{tpu_custom_call.1}
  #allocation0 [shape = 'u32[]', space=smem, size = 0x4, offset = 0x4, fixed_abs, tag = 'smem constant byte address 0x4 - core index']
  #allocation1 [shape = 'u32[144,128]{1,0:T(1,128)}', space=vmem, size = 0x12000, scoped, tag = 'internal scratch']
  #allocation2 [shape = 'f32[1,1]{1,0:T(1,128)}', space=vmem, size = 0x200, scoped, tag = 'scratch operand']
  %s0 = inlined_call_operand.hbm [shape: f32[64,137], index: 0, kind: input, shape index: {}]
  %s1 = inlined_call_operand.vmem [shape: s32[64,1], index: 1, kind: input, shape index: {}]
  %s2 = inlined_call_operand.vmem [shape: s32[1,137], index: 2, kind: input, shape index: {}]
  %s3 = inlined_call_operand.hbm [shape: f32[1,1], index: 3, kind: output, shape index: {}]
  %s4 = sld [smem:[#allocation0]]
  $region34: #{tpu_custom_call.1} parent=0
    _
  %s6 = ssub.s32 1, %s4
  %s7 = scalar_select 0, %s6, %s4
  $region1: #{tpu_custom_call.1} parent=0
    #allocation3 [shape = 'u8[65536]{0}', space=vmem, size = 0x10000, scoped, tag = 'input window, operand 0, single buffered']
    #allocation4 [shape = 's32[1]{0}', space=sflag, size = 0x4, scoped, tag = 'scoped memory for tpu_custom_call.1']
    #allocation5 [shape = 's32[1]{0}', space=sflag, size = 0x4, scoped, tag = 'scoped memory for tpu_custom_call.1']
    #allocation6 [shape = 'u8[512]{0}', space=vmem, size = 0x400, scoped, tag = 'output window, operand 0, single buffered']
    %8 = vsyncpa [#allocation4], 0
    %9 = vsyncpa [#allocation5], 0
    // Predicated region
    $region2: #{tpu_custom_call.1} parent=1 // pred_check
      _
    $region3: #{tpu_custom_call.1} parent=1 // pred_check_branch
      %11 = sbr.rel (0) target = $region5
    $region4: #{tpu_custom_call.1} parent=1 // pred_region
      %s12 = sadd.s32 0, 0
      %s13 = smul.u32 8, %s12
      %s15 = ssub.s32 2048, 2048
      %16 = vsyncadd [#allocation4], %s15
      %s17 = smul.addr %s13, 2
      %s18 = smul.addr %s17, 128
      %s19 = scalar_lea.hbm %s0, %s18
      %s20 = sshll.u32 [#allocation3], 4
      %s21 = int_to_ptr.vmem [resolvable:$true] %s20
      %26 = dma.hbm_to_vmem [thread:$0]  %s19, 2048, %s21, [#allocation4], 256, 256, 16
    $region5: #{tpu_custom_call.1} parent=1 // pred_fallthru
      _
    // Predicated region
    $region6: #{tpu_custom_call.1} parent=1 // pred_check
      _
    $region7: #{tpu_custom_call.1} parent=1 // pred_check_branch
      %28 = sbr.rel (0) target = $region9
    $region8: #{tpu_custom_call.1} parent=1 // pred_region
      %s29 = sadd.s32 0, 0
      %s30 = smul.u32 8, %s29
      %p31 = scmp.lt.s32.totalorder %s30, 7
      %s32 = scalar_select %p31, %s30, 7
      %s33 = smul.addr %s32, 8
      %s34 = scalar_lea.vmem %s1, %s33
      %s35 = sadd.s32 0, 0
      %s36 = smul.u32 8, %s35
    $region9: #{tpu_custom_call.1} parent=1 // pred_fallthru
      _
    // Predicated region
    $region10: #{tpu_custom_call.1} parent=1 // pred_check
      _
    $region11: #{tpu_custom_call.1} parent=1 // pred_check_branch
      %38 = sbr.rel (0) target = $region13
    $region12: #{tpu_custom_call.1} parent=1 // pred_region
      _
    $region13: #{tpu_custom_call.1} parent=1 // pred_fallthru
      _
    // Predicated region
    $region14: #{tpu_custom_call.1} parent=1 // pred_check
      _
    $region15: #{tpu_custom_call.1} parent=1 // pred_check_branch
      %40 = sbr.rel (0) target = $region17
    $region16: #{tpu_custom_call.1} parent=1 // pred_region
      %41 = dma.done [#allocation4], 2048
    $region17: #{tpu_custom_call.1} parent=1 // pred_fallthru
      _
    %s42 = sadd.s32 0, 0
    %s43 = smul.u32 8, %s42
    %p44 = scmp.lt.s32.totalorder %s43, 7
    %s45 = scalar_select %p44, %s43, 7
    %s46 = smul.addr %s45, 8
    %s47 = scalar_lea.vmem %s1, %s46
    %s48 = sadd.s32 0, 0
    %s49 = smul.u32 8, %s48
    %s50 = sadd.s32 0, 0
    %s51 = smul.u32 8, %s50
    %p52 = scmp.lt.s32.totalorder %s51, 7
    %s53 = scalar_select %p52, %s51, 7
    %s54 = smul.addr %s53, 8
    %s55 = scalar_lea.vmem %s1, %s54
    %s56 = sadd.s32 0, 0
    %s57 = smul.u32 8, %s56
    %p58 = scmp.eq.s32.totalorder 0, 0
    // Predicated region
    $region18: #{tpu_custom_call.1} parent=1 // pred_check
      %p59 = pneg %p58
    $region19: #{tpu_custom_call.1} parent=1 // pred_check_branch
      %61 = sbr.rel (%p59) target = $region21
    $region20: #{tpu_custom_call.1} parent=1 // pred_region
      %vm62 = vcmask 0
      %63 = vst.msk [vmem:[#allocation2] sm:$0x1] %vm62, 0.0
    $region21: #{tpu_custom_call.1} parent=1 // pred_fallthru
      _
    %v64 = vld [vmem:[#allocation3] sm:$0xff]
    %v65 = vld [vmem:[#allocation3 + $0x8] sm:$0xff]
    %v66 = vld [vmem:[#allocation3 + $0x10] sm:$0xff]
    %v67 = vld [vmem:[#allocation3 + $0x18] sm:$0xff]
    %v68 = vld [vmem:[#allocation3 + $0x20] sm:$0xff]
    %v69 = vld [vmem:[#allocation3 + $0x28] sm:$0xff]
    %v70 = vld [vmem:[#allocation3 + $0x30] sm:$0xff]
    %v71 = vld [vmem:[#allocation3 + $0x38] sm:$0xff]
    %v72 = vld [vmem:[#allocation3 + $0x40] sm:$0xff]
    %v73 = vld [vmem:[#allocation3 + $0x48] sm:$0xff]
    %v74 = vld [vmem:[#allocation3 + $0x50] sm:$0xff]
    %v75 = vld [vmem:[#allocation3 + $0x58] sm:$0xff]
    %v76 = vld [vmem:[#allocation3 + $0x60] sm:$0xff]
    %v77 = vld [vmem:[#allocation3 + $0x68] sm:$0xff]
    %v78 = vld [vmem:[#allocation3 + $0x70] sm:$0xff]
    %v79 = vld [vmem:[#allocation3 + $0x78] sm:$0xff]
    %v80 = vld [vmem:[%s55] sm:$0xff]
    %v81 = vld [vmem:[%s55 + $0x8] sm:$0xff]
    %v82 = vld [vmem:[%s55 + $0x10] sm:$0xff]
    %v83 = vld [vmem:[%s55 + $0x18] sm:$0xff]
    %v84 = vld [vmem:[%s55 + $0x20] sm:$0xff]
    %v85 = vld [vmem:[%s55 + $0x28] sm:$0xff]
    %v86 = vld [vmem:[%s55 + $0x30] sm:$0xff]
    %v87 = vld [vmem:[%s55 + $0x38] sm:$0xff]
    %v88 = vld [vmem:[%s2] sm:$0x3]
    %v89 = vlaneseq
    %v90 = vshrl.u32 %v89, 7
    %v91 = vsub.s32 0, %v90
    %v92 = vrot.slane %v88, %v91
    %v93 = vlaneseq
    %v94 = vshrl.u32 %v93, 7
    %v95 = vsub.s32 1, %v94
    %v96 = vrot.slane %v88, %v95
    %97 = vset.pattern.permute.xlu0 0
    %98 = vperm.xlu0 %97, %v80
    %v99 = vpop.permute.xlu0 %98
    %100 = vset.pattern.permute.xlu0 0
    %101 = vperm.xlu0 %100, %v81
    %v102 = vpop.permute.xlu0 %101
    %103 = vset.pattern.permute.xlu0 0
    %104 = vperm.xlu0 %103, %v82
    %v105 = vpop.permute.xlu0 %104
    %106 = vset.pattern.permute.xlu0 0
    %107 = vperm.xlu0 %106, %v83
    %v108 = vpop.permute.xlu0 %107
    %109 = vset.pattern.permute.xlu0 0
    %110 = vperm.xlu0 %109, %v84
    %v111 = vpop.permute.xlu0 %110
    %112 = vset.pattern.permute.xlu0 0
    %113 = vperm.xlu0 %112, %v85
    %v114 = vpop.permute.xlu0 %113
    %115 = vset.pattern.permute.xlu0 0
    %116 = vperm.xlu0 %115, %v86
    %v117 = vpop.permute.xlu0 %116
    %118 = vset.pattern.permute.xlu0 0
    %119 = vperm.xlu0 %118, %v87
    %v120 = vpop.permute.xlu0 %119
    %vm121 = vcmp.eq.s32.totalorder %v92, %v99
    %vm122 = vcmp.eq.s32.totalorder %v96, %v99
    %vm123 = vcmp.eq.s32.totalorder %v92, %v102
    %vm124 = vcmp.eq.s32.totalorder %v96, %v102
    %vm125 = vcmp.eq.s32.totalorder %v92, %v105
    %vm126 = vcmp.eq.s32.totalorder %v96, %v105
    %vm127 = vcmp.eq.s32.totalorder %v92, %v108
    %vm128 = vcmp.eq.s32.totalorder %v96, %v108
    %vm129 = vcmp.eq.s32.totalorder %v92, %v111
    %vm130 = vcmp.eq.s32.totalorder %v96, %v111
    %vm131 = vcmp.eq.s32.totalorder %v92, %v114
    %vm132 = vcmp.eq.s32.totalorder %v96, %v114
    %vm133 = vcmp.eq.s32.totalorder %v92, %v117
    %vm134 = vcmp.eq.s32.totalorder %v96, %v117
    %vm135 = vcmp.eq.s32.totalorder %v92, %v120
    %vm136 = vcmp.eq.s32.totalorder %v96, %v120
    %v137 = vsel %vm121, 0.9, 0.00073529413
    %v138 = vsel %vm122, 0.9, 0.00073529413
    %v139 = vsel %vm123, 0.9, 0.00073529413
    %v140 = vsel %vm124, 0.9, 0.00073529413
    %v141 = vsel %vm125, 0.9, 0.00073529413
    %v142 = vsel %vm126, 0.9, 0.00073529413
    %v143 = vsel %vm127, 0.9, 0.00073529413
    %v144 = vsel %vm128, 0.9, 0.00073529413
    %v145 = vsel %vm129, 0.9, 0.00073529413
    %v146 = vsel %vm130, 0.9, 0.00073529413
    %v147 = vsel %vm131, 0.9, 0.00073529413
    %v148 = vsel %vm132, 0.9, 0.00073529413
    %v149 = vsel %vm133, 0.9, 0.00073529413
    %v150 = vsel %vm134, 0.9, 0.00073529413
    %v151 = vsel %vm135, 0.9, 0.00073529413
    %v152 = vsel %vm136, 0.9, 0.00073529413
    %v153 = vmul.f32 %v137, %v64
    %v154 = vmul.f32 %v138, %v65
    %v155 = vmul.f32 %v139, %v66
    %v156 = vmul.f32 %v140, %v67
    %v157 = vmul.f32 %v141, %v68
    %v158 = vmul.f32 %v142, %v69
    %v159 = vmul.f32 %v143, %v70
    %v160 = vmul.f32 %v144, %v71
    %v161 = vmul.f32 %v145, %v72
    %v162 = vmul.f32 %v146, %v73
    %v163 = vmul.f32 %v147, %v74
    %v164 = vmul.f32 %v148, %v75
    %v165 = vmul.f32 %v149, %v76
    %v166 = vmul.f32 %v150, %v77
    %v167 = vmul.f32 %v151, %v78
    %v168 = vmul.f32 %v152, %v79
    %v169 = vld [vmem:[#allocation2] sm:$0x1]
    %vm170 = vcmask 72704
    %v171 = vsel %vm170, %v154, 0.0
    %v172 = vadd.f32 %v153, %v171
    %v173 = vadd.f32 %v172, %v155
    %v174 = vsel %vm170, %v156, 0.0
    %v175 = vadd.f32 %v173, %v174
    %v176 = vadd.f32 %v175, %v157
    %v177 = vsel %vm170, %v158, 0.0
    %v178 = vadd.f32 %v176, %v177
    %v179 = vadd.f32 %v178, %v159
    %v180 = vsel %vm170, %v160, 0.0
    %v181 = vadd.f32 %v179, %v180
    %v182 = vadd.f32 %v181, %v161
    %v183 = vsel %vm170, %v162, 0.0
    %v184 = vadd.f32 %v182, %v183
    %v185 = vadd.f32 %v184, %v163
    %v186 = vsel %vm170, %v164, 0.0
    %v187 = vadd.f32 %v185, %v186
    %v188 = vadd.f32 %v187, %v165
    %v189 = vsel %vm170, %v166, 0.0
    %v190 = vadd.f32 %v188, %v189
    %v191 = vadd.f32 %v190, %v167
    %v192 = vsel %vm170, %v168, 0.0
    %v193 = vadd.f32 %v191, %v192
    %194 = vadd.xlane.f32.xlu0 %v193
    %v195 = vpop.xlane.xlu0 %194
    %v196 = vrot.slane %v195, 4
    %v197 = vadd.f32 %v195, %v196
    %v198 = vrot.slane %v197, 2
    %v199 = vadd.f32 %v197, %v198
    %v200 = vrot.slane %v199, 1
    %v201 = vadd.f32 %v199, %v200
    %s202 = vtos %v201
    %v203 = vstv %s202
    %v204 = vadd.f32 %v169, %v203
    %vm205 = vcmask 0
    %206 = vst.msk [vmem:[#allocation2] sm:$0x1] %vm205, %v204
    // Predicated region
    $region22: #{tpu_custom_call.1} parent=1 // pred_check
      %p207 = pneg %p58
    $region23: #{tpu_custom_call.1} parent=1 // pred_check_branch
      %209 = sbr.rel (%p207) target = $region25
    $region24: #{tpu_custom_call.1} parent=1 // pred_region
      %v210 = vld [vmem:[#allocation2] sm:$0x1]
      %v211 = vsub.f32 0.0, %v210
      %212 = vst.msk [vmem:[#allocation6] sm:$0x1] %vm205, %v211
    $region25: #{tpu_custom_call.1} parent=1 // pred_fallthru
      _
    // Predicated region
    $region26: #{tpu_custom_call.1} parent=1 // pred_check
      _
    $region27: #{tpu_custom_call.1} parent=1 // pred_check_branch
      %214 = sbr.rel (0) target = $region29
    $region28: #{tpu_custom_call.1} parent=1 // pred_region
      %s216 = ssub.s32 16, 16
      %217 = vsyncadd [#allocation5], %s216
      %s219 = sshll.u32 [#allocation6], 4
      %s220 = int_to_ptr.vmem [resolvable:$true] %s219
      %222 = dma.vmem_to_hbm [thread:$0]  %s220, 16, %s3, [#allocation5]
    $region29: #{tpu_custom_call.1} parent=1 // pred_fallthru
      _
    // Predicated region
    $region30: #{tpu_custom_call.1} parent=1 // pred_check
      _
    $region31: #{tpu_custom_call.1} parent=1 // pred_check_branch
      %224 = sbr.rel (0) target = $region33
    $region32: #{tpu_custom_call.1} parent=1 // pred_region
      %225 = dma.done [#allocation5], 16
    $region33: #{tpu_custom_call.1} parent=1 // pred_fallthru
      _
    %226 = vsyncpa [#allocation4], 1
    %227 = vsyncpa [#allocation5], 1

</llo_original>
